<compile_context>
chip_gen: v6e
topology: v6e:2x2x1
jax: 0.10.0
libtpu: 0.0.40
codegen_flags: <defaults>
</compile_context>

<pallas_src>
import numpy as np
import jax
import jax.numpy as jnp
from jax.experimental import pallas as pl
from jax.experimental.pallas import tpu as pltpu


def _rope_expand_kernel(t_ref, hw_ref, out_ref):
    """One grid step = TF frame indices; emits a (2, TF, pph, lane) slab.

    t_ref  : (TF, 2, lane)   temporal templates for this frame block
             ([:, 0] = cos, [:, 1] = sin; zero outside the temporal segment)
    hw_ref : (2, pph, lane)  height+width templates (grid-invariant,
             single-buffered; zero on the temporal segment)
    out_ref: (2, TF, pph, lane) fused cos/sin output block
    """
    # Masked-add "concat": each template is zero outside its own feature
    # segment, so a broadcast add reproduces concat([t, h, w], -1).
    # Slices are taken directly on the refs so the loaded values already have
    # the broadcast-ready ranks (no in-kernel reshape/relayout).
    out_ref[0] = t_ref[:, 0:1, :] + hw_ref[0:1]    # (TF,1,L)+(1,pph,L)
    out_ref[1] = t_ref[:, 1:2, :] + hw_ref[1:2]


def _choose_frames_per_block(ppf, pph, lane):
    """Frames per grid step (TF).

    Budget the fused (2, TF, pph, lane) f32 output block at <= 4 MiB so that
    with double buffering (+ the single-buffered hw template + tiny temporal
    blocks) total VMEM stays well inside v5e's 16 MiB scoped default
    (v6e / v7x defaults are 32 MiB; v7x physical is only 64 MiB, so staying
    conservative keeps it safe there too without touching vmem_limit_bytes).
    Keep >= 2 grid steps when possible so v7x can shard the "parallel" frame
    axis across its two TensorCores.
    """
    per_frame = 2 * pph * lane * 4
    cap = max(1, (4 << 20) // max(per_frame, 1))
    if ppf >= 2:
        cap = max(1, min(cap, ppf // 2))
    cap = min(cap, ppf)
    for tf in range(cap, 0, -1):        # largest divisor -> no partial blocks
        if ppf % tf == 0:
            return tf
    return 1


def _make_table_builder(ppf, pph, ppw, half):
    """Returns a jitted fn (t_tab, hw_tab) -> complex64 (1, 1, N, half)."""
    lane = ppw * half
    tf = _choose_frames_per_block(ppf, pph, lane)

    expand = pl.pallas_call(
        _rope_expand_kernel,
        out_shape=jax.ShapeDtypeStruct((2, ppf, pph, lane), jnp.float32),
        grid_spec=pltpu.PrefetchScalarGridSpec(
            num_scalar_prefetch=0,
            grid=(ppf // tf,),
            in_specs=[
                # temporal template: streamed TF frames per step via the DMA
                # engine (no resident (ppf, lane) copy, no in-kernel dynamic
                # sublane slice).
                pl.BlockSpec((tf, 2, lane), lambda f: (f, 0, 0)),
                # height/width template: grid-invariant -> single buffer.
                pl.BlockSpec((2, pph, lane), lambda f: (0, 0, 0),
                             pipeline_mode=pl.Buffered(1)),
            ],
            out_specs=pl.BlockSpec((2, tf, pph, lane),
                                   lambda f: (0, f, 0, 0)),
        ),
        compiler_params=pltpu.CompilerParams(
            dimension_semantics=("parallel",)),
    )

    def build(t_tab, hw_tab):
        out = expand(t_tab, hw_tab)
        # TODO(synk): residual XLA pass (see header) — out[0]/out[1] are the
        # contiguous cos/sin planes for real-arithmetic consumers.
        freqs = jax.lax.complex(out[0], out[1])          # complex64
        # Row-major (f, h, w*half + c) == (f, h, w, c), so this reshape is exact.
        return freqs.reshape(1, 1, ppf * pph * ppw, half)

    return jax.jit(build)


class WanRotaryPosEmbedPallas:
    """JAX/Pallas port of diffusers' WanRotaryPosEmbed."""

    def __init__(self, attention_head_dim, patch_size, max_seq_len, theta=10000.0):
        self.attention_head_dim = attention_head_dim
        self.patch_size = patch_size
        self.max_seq_len = max_seq_len

        d = attention_head_dim
        h_dim = w_dim = 2 * (d // 6)
        t_dim = d - h_dim - w_dim
        self._dims = (t_dim, h_dim, w_dim)

        pos = np.arange(max_seq_len, dtype=np.float64)
        self._np_cos, self._np_sin = [], []
        for dim in self._dims:
            inv = 1.0 / (
                theta ** (np.arange(0, dim, 2, dtype=np.float64)[: dim // 2] / dim)
            )
            ang = np.outer(pos, inv)                     # float64 angles
            # cos/sin hoisted off-device, computed in f64 for accuracy.
            self._np_cos.append(np.cos(ang).astype(np.float32))
            self._np_sin.append(np.sin(ang).astype(np.float32))

        self._cache = {}

    # ---- lane-dense template construction (tiny, host-side, cached) --------
    def _build_templates(self, f_sl, h_sl, w_sl):
        ct, ch, cw = (t[s] for t, s in zip(self._np_cos, (f_sl, h_sl, w_sl)))
        st, sh, sw = (t[s] for t, s in zip(self._np_sin, (f_sl, h_sl, w_sl)))
        ppf, t_half = ct.shape
        pph, h_half = ch.shape
        ppw, w_half = cw.shape
        half = t_half + h_half + w_half

        # Correctness guard (review): the masked-add "concat" is only valid if
        # the temporal and height/width templates occupy disjoint, covering
        # feature segments of the per-(w) half-width slot.
        assert t_half + h_half + w_half == half
        t_mask = np.zeros(half, np.bool_); t_mask[:t_half] = True
        hw_mask = np.zeros(half, np.bool_); hw_mask[t_half:] = True
        assert not np.any(t_mask & hw_mask) and np.all(t_mask | hw_mask)

        # Temporal template (ppf, 2[cos,sin], ppw*half).  Pre-tiled over ppw on
        # the host: the untiled table is only (ppf, half) so the extra bytes
        # are negligible, and pre-tiling keeps the kernel free of any in-kernel
        # lane-tile/reshape relayout.  It is streamed per frame-block by the
        # BlockSpec, not kept fully VMEM-resident.
        t_buf = np.zeros((ppf, 2, half), np.float32)
        t_buf[:, 0, :t_half] = ct
        t_buf[:, 1, :t_half] = st
        t_tab = np.tile(t_buf, (1, 1, ppw))              # (ppf, 2, ppw*half)

        # Height+width template (2[cos,sin], pph, ppw*half), grid-invariant.
        hw_buf = np.zeros((2, pph, ppw, half), np.float32)
        hw_buf[0, :, :, t_half:t_half + h_half] = ch[:, None, :]
        hw_buf[1, :, :, t_half:t_half + h_half] = sh[:, None, :]
        hw_buf[0, :, :, t_half + h_half:] = cw[None, :, :]
        hw_buf[1, :, :, t_half + h_half:] = sw[None, :, :]
        hw_tab = hw_buf.reshape(2, pph, ppw * half)

        return (jnp.asarray(t_tab), jnp.asarray(hw_tab), ppf, pph, ppw, half)

    def _table(self, f_sl, h_sl, w_sl):
        key = tuple((s.start, s.stop, s.step) for s in (f_sl, h_sl, w_sl))
        if key not in self._cache:
            t_tab, hw_tab, ppf, pph, ppw, half = self._build_templates(
                f_sl, h_sl, w_sl)
            build = _make_table_builder(ppf, pph, ppw, half)
            self._cache[key] = build(t_tab, hw_tab)
        return self._cache[key]

    def __call__(self, hidden_states, scale_factor=None):
        _, _, num_frames, height, width = hidden_states.shape
        p_t, p_h, p_w = self.patch_size
        ppf, pph, ppw = num_frames // p_t, height // p_h, width // p_w

        freqs_ = self._table(slice(0, ppf), slice(0, pph), slice(0, ppw))
        if scale_factor is not None:
            s_t, s_h, s_w = scale_factor
            freqs_c = self._table(slice(0, ppf, s_t), slice(0, pph, s_h),
                                  slice(0, ppw, s_w))
            return freqs_, freqs_c
        return freqs_


def _reference(head_dim, f_pos, h_pos, w_pos, theta=10000.0):
    """float64 numpy reference matching the PyTorch module (complex output)."""
    h_dim = w_dim = 2 * (head_dim // 6)
    t_dim = head_dim - h_dim - w_dim
    segs = []
    for pos, dim in zip((f_pos, h_pos, w_pos), (t_dim, h_dim, w_dim)):
        inv = 1.0 / theta ** (np.arange(0, dim, 2, dtype=np.float64)[: dim // 2] / dim)
        segs.append(np.outer(np.asarray(pos, np.float64), inv))
    t, h, w = segs
    ppf, pph, ppw = len(f_pos), len(h_pos), len(w_pos)
    ang = np.concatenate([
        np.broadcast_to(t[:, None, None, :], (ppf, pph, ppw, t.shape[1])),
        np.broadcast_to(h[None, :, None, :], (ppf, pph, ppw, h.shape[1])),
        np.broadcast_to(w[None, None, :, :], (ppf, pph, ppw, w.shape[1])),
    ], axis=-1).reshape(1, 1, ppf * pph * ppw, -1)
    return np.cos(ang) + 1j * np.sin(ang)


if __name__ == "__main__":
    key = jax.random.PRNGKey(0)
    # (batch, channels, frames, height, width) = NCTHW
    hidden_states = jax.random.normal(key, (2, 4, 8, 16, 16), dtype=jnp.float32)

    rope = WanRotaryPosEmbedPallas(
        attention_head_dim=32, patch_size=(1, 2, 2), max_seq_len=64
    )

    # main path: ppf=8, pph=8, ppw=8, half=16 -> lane width ppw*half = 128,
    # TF=4 frames per step -> grid of 2 parallel steps.
    freqs = rope(hidden_states)
    jax.block_until_ready(freqs)
    assert freqs.shape == (1, 1, 8 * 8 * 8, 16), freqs.shape
    ref = _reference(32, np.arange(8), np.arange(8), np.arange(8))
    np.testing.assert_allclose(np.asarray(freqs), ref, rtol=1e-5, atol=1e-6)

    # scale_factor path
    freqs_, freqs_c = rope(hidden_states, scale_factor=(2, 2, 2))
    jax.block_until_ready((freqs_, freqs_c))
    assert freqs_c.shape == (1, 1, 4 * 4 * 4, 16), freqs_c.shape
    ref_c = _reference(32, np.arange(0, 8, 2), np.arange(0, 8, 2), np.arange(0, 8, 2))
    np.testing.assert_allclose(np.asarray(freqs_), ref, rtol=1e-5, atol=1e-6)
    np.testing.assert_allclose(np.asarray(freqs_c), ref_c, rtol=1e-5, atol=1e-6)

    # memoization: same resolution -> no recompute, same array object
    freqs2 = rope(hidden_states)
    assert freqs2 is freqs

    print("KERNEL_OK")
</pallas_src>

<mosaic_0001>
module attributes {stable_mosaic.version = 11 : i64} {
  func.func @_rope_expand_kernel(%arg0: i32, %arg1: memref<4x2x128xf32, #tpu.memory_space<vmem>>, %arg2: memref<2x8x128xf32, #tpu.memory_space<vmem>>, %arg3: memref<2x4x8x128xf32, #tpu.memory_space<vmem>>) attributes {dimension_semantics = [#tpu.dimension_semantics<parallel>], iteration_bounds = array<i64: 2>, scalar_prefetch = 0 : i64, scratch_operands = 0 : i64, tpu.core_type = #tpu.core_type<tc>, window_params = [{transform_indices = @transform_0, window_bounds = array<i64: 4, 2, 128>}, {pipeline_mode = #tpu.pipeline_mode<synchronous>, transform_indices = @transform_1, window_bounds = array<i64: 2, 8, 128>}, {transform_indices = @transform_2, window_bounds = array<i64: 2, 4, 8, 128>}]} {
    %c0 = arith.constant 0 : index
    %c0_0 = arith.constant 0 : index
    %c0_1 = arith.constant 0 : index
    %0 = vector.load %arg1[%c0, %c0_0, %c0_1] : memref<4x2x128xf32, #tpu.memory_space<vmem>>, vector<4x1x128xf32>
    %c0_2 = arith.constant 0 : index
    %c0_3 = arith.constant 0 : index
    %c0_4 = arith.constant 0 : index
    %1 = vector.load %arg2[%c0_2, %c0_3, %c0_4] : memref<2x8x128xf32, #tpu.memory_space<vmem>>, vector<1x8x128xf32>
    %2 = vector.broadcast %0 : vector<4x1x128xf32> to vector<4x8x128xf32>
    %3 = vector.broadcast %1 : vector<1x8x128xf32> to vector<4x8x128xf32>
    %4 = arith.addf %2, %3 : vector<4x8x128xf32>
    %c0_5 = arith.constant 0 : index
    %c0_6 = arith.constant 0 : index
    %c0_7 = arith.constant 0 : index
    %c0_8 = arith.constant 0 : index
    %5 = vector.load %arg3[%c0_5, %c0_6, %c0_7, %c0_8] : memref<2x4x8x128xf32, #tpu.memory_space<vmem>>, vector<1x4x8x128xf32>
    %6 = vector.shape_cast %5 : vector<1x4x8x128xf32> to vector<4x8x128xf32>
    %7 = vector.shape_cast %4 : vector<4x8x128xf32> to vector<1x4x8x128xf32>
    tpu.vector_store %arg3[%c0_5, %c0_6, %c0_7, %c0_8], %7 {strides = array<i32>} : memref<2x4x8x128xf32, #tpu.memory_space<vmem>>, vector<1x4x8x128xf32>,
    %c0_9 = arith.constant 0 : index
    %c1 = arith.constant 1 : index
    %c0_10 = arith.constant 0 : index
    %8 = vector.load %arg1[%c0_9, %c1, %c0_10] : memref<4x2x128xf32, #tpu.memory_space<vmem>>, vector<4x1x128xf32>
    %c1_11 = arith.constant 1 : index
    %c0_12 = arith.constant 0 : index
    %c0_13 = arith.constant 0 : index
    %9 = vector.load %arg2[%c1_11, %c0_12, %c0_13] : memref<2x8x128xf32, #tpu.memory_space<vmem>>, vector<1x8x128xf32>
    %10 = vector.broadcast %8 : vector<4x1x128xf32> to vector<4x8x128xf32>
    %11 = vector.broadcast %9 : vector<1x8x128xf32> to vector<4x8x128xf32>
    %12 = arith.addf %10, %11 : vector<4x8x128xf32>
    %c1_14 = arith.constant 1 : index
    %c0_15 = arith.constant 0 : index
    %c0_16 = arith.constant 0 : index
    %c0_17 = arith.constant 0 : index
    %13 = vector.load %arg3[%c1_14, %c0_15, %c0_16, %c0_17] : memref<2x4x8x128xf32, #tpu.memory_space<vmem>>, vector<1x4x8x128xf32>
    %14 = vector.shape_cast %13 : vector<1x4x8x128xf32> to vector<4x8x128xf32>
    %15 = vector.shape_cast %12 : vector<4x8x128xf32> to vector<1x4x8x128xf32>
    tpu.vector_store %arg3[%c1_14, %c0_15, %c0_16, %c0_17], %15 {strides = array<i32>} : memref<2x4x8x128xf32, #tpu.memory_space<vmem>>, vector<1x4x8x128xf32>,
    return
  }
  func.func @transform_0(%arg0: i32) -> (i32, i32, i32) {
    %c0_i32 = arith.constant 0 : i32
    %c0_i32_0 = arith.constant 0 : i32
    %c0_i32_1 = arith.constant 0 : i32
    return %arg0, %c0_i32, %c0_i32_0 : i32, i32, i32
  }
  func.func @transform_1(%arg0: i32) -> (i32, i32, i32) {
    %c0_i32 = arith.constant 0 : i32
    %c0_i32_0 = arith.constant 0 : i32
    %c0_i32_1 = arith.constant 0 : i32
    %c0_i32_2 = arith.constant 0 : i32
    return %c0_i32, %c0_i32_0, %c0_i32_1 : i32, i32, i32
  }
  func.func @transform_2(%arg0: i32) -> (i32, i32, i32, i32) {
    %c0_i32 = arith.constant 0 : i32
    %c0_i32_0 = arith.constant 0 : i32
    %c0_i32_1 = arith.constant 0 : i32
    %c0_i32_2 = arith.constant 0 : i32
    return %c0_i32, %arg0, %c0_i32_0, %c0_i32_1 : i32, i32, i32, i32
  }
}

</mosaic_0001>

<llo_original>
// kernel: custom-call
$region0: #{custom-call}
  %s0 = inlined_call_operand.vmem [shape: f32[1,1,512,16], index: 0, kind: input, shape index: {}]
  %s1 = inlined_call_operand.vmem [shape: f32[1,1,512,16], index: 1, kind: input, shape index: {}]
  %s2 = inlined_call_operand.vmem [shape: c64[1,1,512,16], index: 2, kind: output, shape index: {}]
  %s4 = scalar_lea.vmem %s2, 512
  %v5 = vld [vmem:[%s0] sm:$0xff]
  %6 = vst [vmem:[%s2] sm:$0xff] %v5
  %s7 = scalar_lea.vmem %s2, 8
  %s8 = scalar_lea.vmem %s0, 8
  %v9 = vld [vmem:[%s8] sm:$0xff]
  %10 = vst [vmem:[%s7] sm:$0xff] %v9
  %s11 = scalar_lea.vmem %s2, 16
  %s12 = scalar_lea.vmem %s0, 16
  %v13 = vld [vmem:[%s12] sm:$0xff]
  %14 = vst [vmem:[%s11] sm:$0xff] %v13
  %s15 = scalar_lea.vmem %s2, 24
  %s16 = scalar_lea.vmem %s0, 24
  %v17 = vld [vmem:[%s16] sm:$0xff]
  %18 = vst [vmem:[%s15] sm:$0xff] %v17
  %s19 = scalar_lea.vmem %s2, 32
  %s20 = scalar_lea.vmem %s0, 32
  %v21 = vld [vmem:[%s20] sm:$0xff]
  %22 = vst [vmem:[%s19] sm:$0xff] %v21
  %s23 = scalar_lea.vmem %s2, 40
  %s24 = scalar_lea.vmem %s0, 40
  %v25 = vld [vmem:[%s24] sm:$0xff]
  %26 = vst [vmem:[%s23] sm:$0xff] %v25
  %s27 = scalar_lea.vmem %s2, 48
  %s28 = scalar_lea.vmem %s0, 48
  %v29 = vld [vmem:[%s28] sm:$0xff]
  %30 = vst [vmem:[%s27] sm:$0xff] %v29
  %s31 = scalar_lea.vmem %s2, 56
  %s32 = scalar_lea.vmem %s0, 56
  %v33 = vld [vmem:[%s32] sm:$0xff]
  %34 = vst [vmem:[%s31] sm:$0xff] %v33
  %s35 = scalar_lea.vmem %s2, 64
  %s36 = scalar_lea.vmem %s0, 64
  %v37 = vld [vmem:[%s36] sm:$0xff]
  %38 = vst [vmem:[%s35] sm:$0xff] %v37
  %s39 = scalar_lea.vmem %s2, 72
  %s40 = scalar_lea.vmem %s0, 72
  %v41 = vld [vmem:[%s40] sm:$0xff]
  %42 = vst [vmem:[%s39] sm:$0xff] %v41
  %s43 = scalar_lea.vmem %s2, 80
  %s44 = scalar_lea.vmem %s0, 80
  %v45 = vld [vmem:[%s44] sm:$0xff]
  %46 = vst [vmem:[%s43] sm:$0xff] %v45
  %s47 = scalar_lea.vmem %s2, 88
  %s48 = scalar_lea.vmem %s0, 88
  %v49 = vld [vmem:[%s48] sm:$0xff]
  %50 = vst [vmem:[%s47] sm:$0xff] %v49
  %s51 = scalar_lea.vmem %s2, 96
  %s52 = scalar_lea.vmem %s0, 96
  %v53 = vld [vmem:[%s52] sm:$0xff]
  %54 = vst [vmem:[%s51] sm:$0xff] %v53
  %s55 = scalar_lea.vmem %s2, 104
  %s56 = scalar_lea.vmem %s0, 104
  %v57 = vld [vmem:[%s56] sm:$0xff]
  %58 = vst [vmem:[%s55] sm:$0xff] %v57
  %s59 = scalar_lea.vmem %s2, 112
  %s60 = scalar_lea.vmem %s0, 112
  %v61 = vld [vmem:[%s60] sm:$0xff]
  %62 = vst [vmem:[%s59] sm:$0xff] %v61
  %s63 = scalar_lea.vmem %s2, 120
  %s64 = scalar_lea.vmem %s0, 120
  %v65 = vld [vmem:[%s64] sm:$0xff]
  %66 = vst [vmem:[%s63] sm:$0xff] %v65
  %s67 = scalar_lea.vmem %s2, 128
  %s68 = scalar_lea.vmem %s0, 128
  %v69 = vld [vmem:[%s68] sm:$0xff]
  %70 = vst [vmem:[%s67] sm:$0xff] %v69
  %s71 = scalar_lea.vmem %s2, 136
  %s72 = scalar_lea.vmem %s0, 136
  %v73 = vld [vmem:[%s72] sm:$0xff]
  %74 = vst [vmem:[%s71] sm:$0xff] %v73
  %s75 = scalar_lea.vmem %s2, 144
  %s76 = scalar_lea.vmem %s0, 144
  %v77 = vld [vmem:[%s76] sm:$0xff]
  %78 = vst [vmem:[%s75] sm:$0xff] %v77
  %s79 = scalar_lea.vmem %s2, 152
  %s80 = scalar_lea.vmem %s0, 152
  %v81 = vld [vmem:[%s80] sm:$0xff]
  %82 = vst [vmem:[%s79] sm:$0xff] %v81
  %s83 = scalar_lea.vmem %s2, 160
  %s84 = scalar_lea.vmem %s0, 160
  %v85 = vld [vmem:[%s84] sm:$0xff]
  %86 = vst [vmem:[%s83] sm:$0xff] %v85
  %s87 = scalar_lea.vmem %s2, 168
  %s88 = scalar_lea.vmem %s0, 168
  %v89 = vld [vmem:[%s88] sm:$0xff]
  %90 = vst [vmem:[%s87] sm:$0xff] %v89
  %s91 = scalar_lea.vmem %s2, 176
  %s92 = scalar_lea.vmem %s0, 176
  %v93 = vld [vmem:[%s92] sm:$0xff]
  %94 = vst [vmem:[%s91] sm:$0xff] %v93
  %s95 = scalar_lea.vmem %s2, 184
  %s96 = scalar_lea.vmem %s0, 184
  %v97 = vld [vmem:[%s96] sm:$0xff]
  %98 = vst [vmem:[%s95] sm:$0xff] %v97
  %s99 = scalar_lea.vmem %s2, 192
  %s100 = scalar_lea.vmem %s0, 192
  %v101 = vld [vmem:[%s100] sm:$0xff]
  %102 = vst [vmem:[%s99] sm:$0xff] %v101
  %s103 = scalar_lea.vmem %s2, 200
  %s104 = scalar_lea.vmem %s0, 200
  %v105 = vld [vmem:[%s104] sm:$0xff]
  %106 = vst [vmem:[%s103] sm:$0xff] %v105
  %s107 = scalar_lea.vmem %s2, 208
  %s108 = scalar_lea.vmem %s0, 208
  %v109 = vld [vmem:[%s108] sm:$0xff]
  %110 = vst [vmem:[%s107] sm:$0xff] %v109
  %s111 = scalar_lea.vmem %s2, 216
  %s112 = scalar_lea.vmem %s0, 216
  %v113 = vld [vmem:[%s112] sm:$0xff]
  %114 = vst [vmem:[%s111] sm:$0xff] %v113
  %s115 = scalar_lea.vmem %s2, 224
  %s116 = scalar_lea.vmem %s0, 224
  %v117 = vld [vmem:[%s116] sm:$0xff]
  %118 = vst [vmem:[%s115] sm:$0xff] %v117
  %s119 = scalar_lea.vmem %s2, 232
  %s120 = scalar_lea.vmem %s0, 232
  %v121 = vld [vmem:[%s120] sm:$0xff]
  %122 = vst [vmem:[%s119] sm:$0xff] %v121
  %s123 = scalar_lea.vmem %s2, 240
  %s124 = scalar_lea.vmem %s0, 240
  %v125 = vld [vmem:[%s124] sm:$0xff]
  %126 = vst [vmem:[%s123] sm:$0xff] %v125
  %s127 = scalar_lea.vmem %s2, 248
  %s128 = scalar_lea.vmem %s0, 248
  %v129 = vld [vmem:[%s128] sm:$0xff]
  %130 = vst [vmem:[%s127] sm:$0xff] %v129
  %s131 = scalar_lea.vmem %s2, 256
  %s132 = scalar_lea.vmem %s0, 256
  %v133 = vld [vmem:[%s132] sm:$0xff]
  %134 = vst [vmem:[%s131] sm:$0xff] %v133
  %s135 = scalar_lea.vmem %s2, 264
  %s136 = scalar_lea.vmem %s0, 264
  %v137 = vld [vmem:[%s136] sm:$0xff]
  %138 = vst [vmem:[%s135] sm:$0xff] %v137
  %s139 = scalar_lea.vmem %s2, 272
  %s140 = scalar_lea.vmem %s0, 272
  %v141 = vld [vmem:[%s140] sm:$0xff]
  %142 = vst [vmem:[%s139] sm:$0xff] %v141
  %s143 = scalar_lea.vmem %s2, 280
  %s144 = scalar_lea.vmem %s0, 280
  %v145 = vld [vmem:[%s144] sm:$0xff]
  %146 = vst [vmem:[%s143] sm:$0xff] %v145
  %s147 = scalar_lea.vmem %s2, 288
  %s148 = scalar_lea.vmem %s0, 288
  %v149 = vld [vmem:[%s148] sm:$0xff]
  %150 = vst [vmem:[%s147] sm:$0xff] %v149
  %s151 = scalar_lea.vmem %s2, 296
  %s152 = scalar_lea.vmem %s0, 296
  %v153 = vld [vmem:[%s152] sm:$0xff]
  %154 = vst [vmem:[%s151] sm:$0xff] %v153
  %s155 = scalar_lea.vmem %s2, 304
  %s156 = scalar_lea.vmem %s0, 304
  %v157 = vld [vmem:[%s156] sm:$0xff]
  %158 = vst [vmem:[%s155] sm:$0xff] %v157
  %s159 = scalar_lea.vmem %s2, 312
  %s160 = scalar_lea.vmem %s0, 312
  %v161 = vld [vmem:[%s160] sm:$0xff]
  %162 = vst [vmem:[%s159] sm:$0xff] %v161
  %s163 = scalar_lea.vmem %s2, 320
  %s164 = scalar_lea.vmem %s0, 320
  %v165 = vld [vmem:[%s164] sm:$0xff]
  %166 = vst [vmem:[%s163] sm:$0xff] %v165
  %s167 = scalar_lea.vmem %s2, 328
  %s168 = scalar_lea.vmem %s0, 328
  %v169 = vld [vmem:[%s168] sm:$0xff]
  %170 = vst [vmem:[%s167] sm:$0xff] %v169
  %s171 = scalar_lea.vmem %s2, 336
  %s172 = scalar_lea.vmem %s0, 336
  %v173 = vld [vmem:[%s172] sm:$0xff]
  %174 = vst [vmem:[%s171] sm:$0xff] %v173
  %s175 = scalar_lea.vmem %s2, 344
  %s176 = scalar_lea.vmem %s0, 344
  %v177 = vld [vmem:[%s176] sm:$0xff]
  %178 = vst [vmem:[%s175] sm:$0xff] %v177
  %s179 = scalar_lea.vmem %s2, 352
  %s180 = scalar_lea.vmem %s0, 352
  %v181 = vld [vmem:[%s180] sm:$0xff]
  %182 = vst [vmem:[%s179] sm:$0xff] %v181
  %s183 = scalar_lea.vmem %s2, 360
  %s184 = scalar_lea.vmem %s0, 360
  %v185 = vld [vmem:[%s184] sm:$0xff]
  %186 = vst [vmem:[%s183] sm:$0xff] %v185
  %s187 = scalar_lea.vmem %s2, 368
  %s188 = scalar_lea.vmem %s0, 368
  %v189 = vld [vmem:[%s188] sm:$0xff]
  %190 = vst [vmem:[%s187] sm:$0xff] %v189
  %s191 = scalar_lea.vmem %s2, 376
  %s192 = scalar_lea.vmem %s0, 376
  %v193 = vld [vmem:[%s192] sm:$0xff]
  %194 = vst [vmem:[%s191] sm:$0xff] %v193
  %s195 = scalar_lea.vmem %s2, 384
  %s196 = scalar_lea.vmem %s0, 384
  %v197 = vld [vmem:[%s196] sm:$0xff]
  %198 = vst [vmem:[%s195] sm:$0xff] %v197
  %s199 = scalar_lea.vmem %s2, 392
  %s200 = scalar_lea.vmem %s0, 392
  %v201 = vld [vmem:[%s200] sm:$0xff]
  %202 = vst [vmem:[%s199] sm:$0xff] %v201
  %s203 = scalar_lea.vmem %s2, 400
  %s204 = scalar_lea.vmem %s0, 400
  %v205 = vld [vmem:[%s204] sm:$0xff]
  %206 = vst [vmem:[%s203] sm:$0xff] %v205
  %s207 = scalar_lea.vmem %s2, 408
  %s208 = scalar_lea.vmem %s0, 408
  %v209 = vld [vmem:[%s208] sm:$0xff]
  %210 = vst [vmem:[%s207] sm:$0xff] %v209
  %s211 = scalar_lea.vmem %s2, 416
  %s212 = scalar_lea.vmem %s0, 416
  %v213 = vld [vmem:[%s212] sm:$0xff]
  %214 = vst [vmem:[%s211] sm:$0xff] %v213
  %s215 = scalar_lea.vmem %s2, 424
  %s216 = scalar_lea.vmem %s0, 424
  %v217 = vld [vmem:[%s216] sm:$0xff]
  %218 = vst [vmem:[%s215] sm:$0xff] %v217
  %s219 = scalar_lea.vmem %s2, 432
  %s220 = scalar_lea.vmem %s0, 432
  %v221 = vld [vmem:[%s220] sm:$0xff]
  %222 = vst [vmem:[%s219] sm:$0xff] %v221
  %s223 = scalar_lea.vmem %s2, 440
  %s224 = scalar_lea.vmem %s0, 440
  %v225 = vld [vmem:[%s224] sm:$0xff]
  %226 = vst [vmem:[%s223] sm:$0xff] %v225
  %s227 = scalar_lea.vmem %s2, 448
  %s228 = scalar_lea.vmem %s0, 448
  %v229 = vld [vmem:[%s228] sm:$0xff]
  %230 = vst [vmem:[%s227] sm:$0xff] %v229
  %s231 = scalar_lea.vmem %s2, 456
  %s232 = scalar_lea.vmem %s0, 456
  %v233 = vld [vmem:[%s232] sm:$0xff]
  %234 = vst [vmem:[%s231] sm:$0xff] %v233
  %s235 = scalar_lea.vmem %s2, 464
  %s236 = scalar_lea.vmem %s0, 464
  %v237 = vld [vmem:[%s236] sm:$0xff]
  %238 = vst [vmem:[%s235] sm:$0xff] %v237
  %s239 = scalar_lea.vmem %s2, 472
  %s240 = scalar_lea.vmem %s0, 472
  %v241 = vld [vmem:[%s240] sm:$0xff]
  %242 = vst [vmem:[%s239] sm:$0xff] %v241
  %s243 = scalar_lea.vmem %s2, 480
  %s244 = scalar_lea.vmem %s0, 480
  %v245 = vld [vmem:[%s244] sm:$0xff]
  %246 = vst [vmem:[%s243] sm:$0xff] %v245
  %s247 = scalar_lea.vmem %s2, 488
  %s248 = scalar_lea.vmem %s0, 488
  %v249 = vld [vmem:[%s248] sm:$0xff]
  %250 = vst [vmem:[%s247] sm:$0xff] %v249
  %s251 = scalar_lea.vmem %s2, 496
  %s252 = scalar_lea.vmem %s0, 496
  %v253 = vld [vmem:[%s252] sm:$0xff]
  %254 = vst [vmem:[%s251] sm:$0xff] %v253
  %s255 = scalar_lea.vmem %s2, 504
  %s256 = scalar_lea.vmem %s0, 504
  %v257 = vld [vmem:[%s256] sm:$0xff]
  %258 = vst [vmem:[%s255] sm:$0xff] %v257
  %v259 = vld [vmem:[%s1] sm:$0xff]
  %260 = vst [vmem:[%s4] sm:$0xff] %v259
  %s261 = scalar_lea.vmem %s4, 8
  %s262 = scalar_lea.vmem %s1, 8
  %v263 = vld [vmem:[%s262] sm:$0xff]
  %264 = vst [vmem:[%s261] sm:$0xff] %v263
  %s265 = scalar_lea.vmem %s4, 16
  %s266 = scalar_lea.vmem %s1, 16
  %v267 = vld [vmem:[%s266] sm:$0xff]
  %268 = vst [vmem:[%s265] sm:$0xff] %v267
  %s269 = scalar_lea.vmem %s4, 24
  %s270 = scalar_lea.vmem %s1, 24
  %v271 = vld [vmem:[%s270] sm:$0xff]
  %272 = vst [vmem:[%s269] sm:$0xff] %v271
  %s273 = scalar_lea.vmem %s4, 32
  %s274 = scalar_lea.vmem %s1, 32
  %v275 = vld [vmem:[%s274] sm:$0xff]
  %276 = vst [vmem:[%s273] sm:$0xff] %v275
  %s277 = scalar_lea.vmem %s4, 40
  %s278 = scalar_lea.vmem %s1, 40
  %v279 = vld [vmem:[%s278] sm:$0xff]
  %280 = vst [vmem:[%s277] sm:$0xff] %v279
  %s281 = scalar_lea.vmem %s4, 48
  %s282 = scalar_lea.vmem %s1, 48
  %v283 = vld [vmem:[%s282] sm:$0xff]
  %284 = vst [vmem:[%s281] sm:$0xff] %v283
  %s285 = scalar_lea.vmem %s4, 56
  %s286 = scalar_lea.vmem %s1, 56
  %v287 = vld [vmem:[%s286] sm:$0xff]
  %288 = vst [vmem:[%s285] sm:$0xff] %v287
  %s289 = scalar_lea.vmem %s4, 64
  %s290 = scalar_lea.vmem %s1, 64
  %v291 = vld [vmem:[%s290] sm:$0xff]
  %292 = vst [vmem:[%s289] sm:$0xff] %v291
  %s293 = scalar_lea.vmem %s4, 72
  %s294 = scalar_lea.vmem %s1, 72
  %v295 = vld [vmem:[%s294] sm:$0xff]
  %296 = vst [vmem:[%s293] sm:$0xff] %v295
  %s297 = scalar_lea.vmem %s4, 80
  %s298 = scalar_lea.vmem %s1, 80
  %v299 = vld [vmem:[%s298] sm:$0xff]
  %300 = vst [vmem:[%s297] sm:$0xff] %v299
  %s301 = scalar_lea.vmem %s4, 88
  %s302 = scalar_lea.vmem %s1, 88
  %v303 = vld [vmem:[%s302] sm:$0xff]
  %304 = vst [vmem:[%s301] sm:$0xff] %v303
  %s305 = scalar_lea.vmem %s4, 96
  %s306 = scalar_lea.vmem %s1, 96
  %v307 = vld [vmem:[%s306] sm:$0xff]
  %308 = vst [vmem:[%s305] sm:$0xff] %v307
  %s309 = scalar_lea.vmem %s4, 104
  %s310 = scalar_lea.vmem %s1, 104
  %v311 = vld [vmem:[%s310] sm:$0xff]
  %312 = vst [vmem:[%s309] sm:$0xff] %v311
  %s313 = scalar_lea.vmem %s4, 112
  %s314 = scalar_lea.vmem %s1, 112
  %v315 = vld [vmem:[%s314] sm:$0xff]
  %316 = vst [vmem:[%s313] sm:$0xff] %v315
  %s317 = scalar_lea.vmem %s4, 120
  %s318 = scalar_lea.vmem %s1, 120
  %v319 = vld [vmem:[%s318] sm:$0xff]
  %320 = vst [vmem:[%s317] sm:$0xff] %v319
  %s321 = scalar_lea.vmem %s4, 128
  %s322 = scalar_lea.vmem %s1, 128
  %v323 = vld [vmem:[%s322] sm:$0xff]
  %324 = vst [vmem:[%s321] sm:$0xff] %v323
  %s325 = scalar_lea.vmem %s4, 136
  %s326 = scalar_lea.vmem %s1, 136
  %v327 = vld [vmem:[%s326] sm:$0xff]
  %328 = vst [vmem:[%s325] sm:$0xff] %v327
  %s329 = scalar_lea.vmem %s4, 144
  %s330 = scalar_lea.vmem %s1, 144
  %v331 = vld [vmem:[%s330] sm:$0xff]
  %332 = vst [vmem:[%s329] sm:$0xff] %v331
  %s333 = scalar_lea.vmem %s4, 152
  %s334 = scalar_lea.vmem %s1, 152
  %v335 = vld [vmem:[%s334] sm:$0xff]
  %336 = vst [vmem:[%s333] sm:$0xff] %v335
  %s337 = scalar_lea.vmem %s4, 160
  %s338 = scalar_lea.vmem %s1, 160
  %v339 = vld [vmem:[%s338] sm:$0xff]
  %340 = vst [vmem:[%s337] sm:$0xff] %v339
  %s341 = scalar_lea.vmem %s4, 168
  %s342 = scalar_lea.vmem %s1, 168
  %v343 = vld [vmem:[%s342] sm:$0xff]
  %344 = vst [vmem:[%s341] sm:$0xff] %v343
  %s345 = scalar_lea.vmem %s4, 176
  %s346 = scalar_lea.vmem %s1, 176
  %v347 = vld [vmem:[%s346] sm:$0xff]
  %348 = vst [vmem:[%s345] sm:$0xff] %v347
  %s349 = scalar_lea.vmem %s4, 184
  %s350 = scalar_lea.vmem %s1, 184
  %v351 = vld [vmem:[%s350] sm:$0xff]
  %352 = vst [vmem:[%s349] sm:$0xff] %v351
  %s353 = scalar_lea.vmem %s4, 192
  %s354 = scalar_lea.vmem %s1, 192
  %v355 = vld [vmem:[%s354] sm:$0xff]
  %356 = vst [vmem:[%s353] sm:$0xff] %v355
  %s357 = scalar_lea.vmem %s4, 200
  %s358 = scalar_lea.vmem %s1, 200
  %v359 = vld [vmem:[%s358] sm:$0xff]
  %360 = vst [vmem:[%s357] sm:$0xff] %v359
  %s361 = scalar_lea.vmem %s4, 208
  %s362 = scalar_lea.vmem %s1, 208
  %v363 = vld [vmem:[%s362] sm:$0xff]
  %364 = vst [vmem:[%s361] sm:$0xff] %v363
  %s365 = scalar_lea.vmem %s4, 216
  %s366 = scalar_lea.vmem %s1, 216
  %v367 = vld [vmem:[%s366] sm:$0xff]
  %368 = vst [vmem:[%s365] sm:$0xff] %v367
  %s369 = scalar_lea.vmem %s4, 224
  %s370 = scalar_lea.vmem %s1, 224
  %v371 = vld [vmem:[%s370] sm:$0xff]
  %372 = vst [vmem:[%s369] sm:$0xff] %v371
  %s373 = scalar_lea.vmem %s4, 232
  %s374 = scalar_lea.vmem %s1, 232
  %v375 = vld [vmem:[%s374] sm:$0xff]
  %376 = vst [vmem:[%s373] sm:$0xff] %v375
  %s377 = scalar_lea.vmem %s4, 240
  %s378 = scalar_lea.vmem %s1, 240
  %v379 = vld [vmem:[%s378] sm:$0xff]
  %380 = vst [vmem:[%s377] sm:$0xff] %v379
  %s381 = scalar_lea.vmem %s4, 248
  %s382 = scalar_lea.vmem %s1, 248
  %v383 = vld [vmem:[%s382] sm:$0xff]
  %384 = vst [vmem:[%s381] sm:$0xff] %v383
  %s385 = scalar_lea.vmem %s4, 256
  %s386 = scalar_lea.vmem %s1, 256
  %v387 = vld [vmem:[%s386] sm:$0xff]
  %388 = vst [vmem:[%s385] sm:$0xff] %v387
  %s389 = scalar_lea.vmem %s4, 264
  %s390 = scalar_lea.vmem %s1, 264
  %v391 = vld [vmem:[%s390] sm:$0xff]
  %392 = vst [vmem:[%s389] sm:$0xff] %v391
  %s393 = scalar_lea.vmem %s4, 272
  %s394 = scalar_lea.vmem %s1, 272
  %v395 = vld [vmem:[%s394] sm:$0xff]
  %396 = vst [vmem:[%s393] sm:$0xff] %v395
  %s397 = scalar_lea.vmem %s4, 280
  %s398 = scalar_lea.vmem %s1, 280
  %v399 = vld [vmem:[%s398] sm:$0xff]
  %400 = vst [vmem:[%s397] sm:$0xff] %v399
  %s401 = scalar_lea.vmem %s4, 288
  %s402 = scalar_lea.vmem %s1, 288
  %v403 = vld [vmem:[%s402] sm:$0xff]
  %404 = vst [vmem:[%s401] sm:$0xff] %v403
  %s405 = scalar_lea.vmem %s4, 296
  %s406 = scalar_lea.vmem %s1, 296
  %v407 = vld [vmem:[%s406] sm:$0xff]
  %408 = vst [vmem:[%s405] sm:$0xff] %v407
  %s409 = scalar_lea.vmem %s4, 304
  %s410 = scalar_lea.vmem %s1, 304
  %v411 = vld [vmem:[%s410] sm:$0xff]
  %412 = vst [vmem:[%s409] sm:$0xff] %v411
  %s413 = scalar_lea.vmem %s4, 312
  %s414 = scalar_lea.vmem %s1, 312
  %v415 = vld [vmem:[%s414] sm:$0xff]
  %416 = vst [vmem:[%s413] sm:$0xff] %v415
  %s417 = scalar_lea.vmem %s4, 320
  %s418 = scalar_lea.vmem %s1, 320
  %v419 = vld [vmem:[%s418] sm:$0xff]
  %420 = vst [vmem:[%s417] sm:$0xff] %v419
  %s421 = scalar_lea.vmem %s4, 328
  %s422 = scalar_lea.vmem %s1, 328
  %v423 = vld [vmem:[%s422] sm:$0xff]
  %424 = vst [vmem:[%s421] sm:$0xff] %v423
  %s425 = scalar_lea.vmem %s4, 336
  %s426 = scalar_lea.vmem %s1, 336
  %v427 = vld [vmem:[%s426] sm:$0xff]
  %428 = vst [vmem:[%s425] sm:$0xff] %v427
  %s429 = scalar_lea.vmem %s4, 344
  %s430 = scalar_lea.vmem %s1, 344
  %v431 = vld [vmem:[%s430] sm:$0xff]
  %432 = vst [vmem:[%s429] sm:$0xff] %v431
  %s433 = scalar_lea.vmem %s4, 352
  %s434 = scalar_lea.vmem %s1, 352
  %v435 = vld [vmem:[%s434] sm:$0xff]
  %436 = vst [vmem:[%s433] sm:$0xff] %v435
  %s437 = scalar_lea.vmem %s4, 360
  %s438 = scalar_lea.vmem %s1, 360
  %v439 = vld [vmem:[%s438] sm:$0xff]
  %440 = vst [vmem:[%s437] sm:$0xff] %v439
  %s441 = scalar_lea.vmem %s4, 368
  %s442 = scalar_lea.vmem %s1, 368
  %v443 = vld [vmem:[%s442] sm:$0xff]
  %444 = vst [vmem:[%s441] sm:$0xff] %v443
  %s445 = scalar_lea.vmem %s4, 376
  %s446 = scalar_lea.vmem %s1, 376
  %v447 = vld [vmem:[%s446] sm:$0xff]
  %448 = vst [vmem:[%s445] sm:$0xff] %v447
  %s449 = scalar_lea.vmem %s4, 384
  %s450 = scalar_lea.vmem %s1, 384
  %v451 = vld [vmem:[%s450] sm:$0xff]
  %452 = vst [vmem:[%s449] sm:$0xff] %v451
  %s453 = scalar_lea.vmem %s4, 392
  %s454 = scalar_lea.vmem %s1, 392
  %v455 = vld [vmem:[%s454] sm:$0xff]
  %456 = vst [vmem:[%s453] sm:$0xff] %v455
  %s457 = scalar_lea.vmem %s4, 400
  %s458 = scalar_lea.vmem %s1, 400
  %v459 = vld [vmem:[%s458] sm:$0xff]
  %460 = vst [vmem:[%s457] sm:$0xff] %v459
  %s461 = scalar_lea.vmem %s4, 408
  %s462 = scalar_lea.vmem %s1, 408
  %v463 = vld [vmem:[%s462] sm:$0xff]
  %464 = vst [vmem:[%s461] sm:$0xff] %v463
  %s465 = scalar_lea.vmem %s4, 416
  %s466 = scalar_lea.vmem %s1, 416
  %v467 = vld [vmem:[%s466] sm:$0xff]
  %468 = vst [vmem:[%s465] sm:$0xff] %v467
  %s469 = scalar_lea.vmem %s4, 424
  %s470 = scalar_lea.vmem %s1, 424
  %v471 = vld [vmem:[%s470] sm:$0xff]
  %472 = vst [vmem:[%s469] sm:$0xff] %v471
  %s473 = scalar_lea.vmem %s4, 432
  %s474 = scalar_lea.vmem %s1, 432
  %v475 = vld [vmem:[%s474] sm:$0xff]
  %476 = vst [vmem:[%s473] sm:$0xff] %v475
  %s477 = scalar_lea.vmem %s4, 440
  %s478 = scalar_lea.vmem %s1, 440
  %v479 = vld [vmem:[%s478] sm:$0xff]
  %480 = vst [vmem:[%s477] sm:$0xff] %v479
  %s481 = scalar_lea.vmem %s4, 448
  %s482 = scalar_lea.vmem %s1, 448
  %v483 = vld [vmem:[%s482] sm:$0xff]
  %484 = vst [vmem:[%s481] sm:$0xff] %v483
  %s485 = scalar_lea.vmem %s4, 456
  %s486 = scalar_lea.vmem %s1, 456
  %v487 = vld [vmem:[%s486] sm:$0xff]
  %488 = vst [vmem:[%s485] sm:$0xff] %v487
  %s489 = scalar_lea.vmem %s4, 464
  %s490 = scalar_lea.vmem %s1, 464
  %v491 = vld [vmem:[%s490] sm:$0xff]
  %492 = vst [vmem:[%s489] sm:$0xff] %v491
  %s493 = scalar_lea.vmem %s4, 472
  %s494 = scalar_lea.vmem %s1, 472
  %v495 = vld [vmem:[%s494] sm:$0xff]
  %496 = vst [vmem:[%s493] sm:$0xff] %v495
  %s497 = scalar_lea.vmem %s4, 480
  %s498 = scalar_lea.vmem %s1, 480
  %v499 = vld [vmem:[%s498] sm:$0xff]
  %500 = vst [vmem:[%s497] sm:$0xff] %v499
  %s501 = scalar_lea.vmem %s4, 488
  %s502 = scalar_lea.vmem %s1, 488
  %v503 = vld [vmem:[%s502] sm:$0xff]
  %504 = vst [vmem:[%s501] sm:$0xff] %v503
  %s505 = scalar_lea.vmem %s4, 496
  %s506 = scalar_lea.vmem %s1, 496
  %v507 = vld [vmem:[%s506] sm:$0xff]
  %508 = vst [vmem:[%s505] sm:$0xff] %v507
  %s509 = scalar_lea.vmem %s4, 504
  %s510 = scalar_lea.vmem %s1, 504
  %v511 = vld [vmem:[%s510] sm:$0xff]
  %512 = vst [vmem:[%s509] sm:$0xff] %v511

// kernel: build.1
$region0: #{build.1}
  #allocation0 [shape = 'u32[]', space=smem, size = 0x4, offset = 0x4, fixed_abs, tag = 'smem constant byte address 0x4 - core index']
  #allocation1 [shape = 'u32[144,128]{1,0:T(1,128)}', space=vmem, size = 0x12000, scoped, tag = 'internal scratch']
  %s0 = inlined_call_operand.hbm [shape: f32[8,2,128], index: 0, kind: input, shape index: {}]
  %s1 = inlined_call_operand.hbm [shape: f32[2,8,128], index: 1, kind: input, shape index: {}]
  %s2 = inlined_call_operand.vmem [shape: f32[2,8,8,128], index: 2, kind: output, shape index: {}]
  %s3 = sld [smem:[#allocation0]]
  $region83: #{build.1} parent=0
    _
  %s5 = ssub.s32 1, %s3
  %s6 = scalar_select 0, %s5, %s3
  $region1: #{build.1} parent=0
    #allocation2 [shape = 'u8[8192]{0}', space=vmem, size = 0x2000, scoped, tag = 'input window, operand 0']
    #allocation3 [shape = 's32[2]{0}', space=sflag, size = 0x8, scoped, tag = 'scoped memory for build.1']
    #allocation4 [shape = 'u8[8192]{0}', space=vmem, size = 0x2000, scoped, tag = 'input window, operand 1, single buffered']
    #allocation5 [shape = 's32[1]{0}', space=sflag, size = 0x4, scoped, tag = 'scoped memory for build.1']
    #allocation6 [shape = 'u8[65536]{0}', space=vmem, size = 0x10000, scoped, tag = 'output window, operand 0']
    %7 = vsyncpa [#allocation3], 0
    %s8 = scalar_lea.sflag [#allocation3], 1
    %9 = vsyncpa %s8, 0
    %10 = vsyncpa [#allocation5], 0
    loop: start=0, step=1, limit=4
    $region2: #{build.1} parent=1 // loop_pre_header
      _
    $region3: #{build.1} parent=1 // loop_header
      %s12 = sphi 0, %s16
      %p13 = scmp.ge.s32.totalorder %s12, 4
      %s22 = sphi 0, %s24
      %s25 = sphi 0, %s22
      %s26 = sphi 0, %s25
      %s42 = sphi 0, %s26
      %s46 = sphi 0, %s46
      %s48 = sphi 0, %s46
      %s49 = sphi 0, %s48
      %s63 = sphi 0, %s49
      %s69 = sphi 0, %s71
      %s72 = sphi 0, %s69
      %s73 = sphi 0, %s72
      %s89 = sphi 0, %s73
    $region4: #{build.1} parent=1 // loop_header_branch
      %15 = sbr.rel (%p13) target = $region8
    $region5: #{build.1} parent=1 // loop_body
      %s17 = ssub.s32 %s12, 1
      %s18 = ssub.s32 %s12, 2
      %s19 = sadd.s32 %s12, 1
      %s20 = ssub.s32 %s12, %s19
      %p21 = scmp.eq.s32.totalorder %s20, 0
      %s23 = sadd.s32 %s22, 1
      %s24 = scalar_select %p21, %s22, %s23
      %p27 = pneg %p21
      %p28 = scmp.eq.s32.totalorder %s12, 1
      %p29 = por %p27, %p28
      %p30 = scmp.ne.s32.totalorder %s22, %s25
      %p31 = scmp.eq.s32.totalorder %s12, 0
      %p32 = por %p30, %p31
      %p33 = scmp.ne.s32.totalorder %s22, %s25
      %p34 = scmp.eq.s32.totalorder %s17, 1
      %p35 = por %p33, %p34
      %p36 = scmp.ne.s32.totalorder %s25, %s26
      %p37 = scmp.eq.s32.totalorder %s17, 0
      %p38 = por %p36, %p37
      %p39 = scmp.ne.s32.totalorder %s25, %s26
      %p40 = scmp.eq.s32.totalorder %s18, 1
      %p41 = por %p39, %p40
      %p43 = scmp.ne.s32.totalorder %s26, %s42
      %p44 = scmp.eq.s32.totalorder %s18, 0
      %p45 = por %p43, %p44
      %s47 = sadd.s32 %s46, 1
      %p50 = scmp.eq.s32.totalorder %s12, 1
      %p51 = scmp.ne.s32.totalorder %s46, %s48
      %p52 = scmp.eq.s32.totalorder %s12, 0
      %p53 = por %p51, %p52
      %p54 = scmp.ne.s32.totalorder %s46, %s48
      %p55 = scmp.eq.s32.totalorder %s17, 1
      %p56 = por %p54, %p55
      %p57 = scmp.ne.s32.totalorder %s48, %s49
      %p58 = scmp.eq.s32.totalorder %s17, 0
      %p59 = por %p57, %p58
      %p60 = scmp.ne.s32.totalorder %s48, %s49
      %p61 = scmp.eq.s32.totalorder %s18, 1
      %p62 = por %p60, %p61
      %p64 = scmp.ne.s32.totalorder %s49, %s63
      %p65 = scmp.eq.s32.totalorder %s18, 0
      %p66 = por %p64, %p65
      %s67 = ssub.s32 %s12, %s19
      %p68 = scmp.eq.s32.totalorder %s67, 0
      %s70 = sadd.s32 %s69, 1
      %s71 = scalar_select %p68, %s69, %s70
      %p74 = pneg %p68
      %p75 = scmp.eq.s32.totalorder %s12, 1
      %p76 = por %p74, %p75
      %p77 = scmp.ne.s32.totalorder %s69, %s72
      %p78 = scmp.eq.s32.totalorder %s12, 0
      %p79 = por %p77, %p78
      %p80 = scmp.ne.s32.totalorder %s69, %s72
      %p81 = scmp.eq.s32.totalorder %s17, 1
      %p82 = por %p80, %p81
      %p83 = scmp.ne.s32.totalorder %s72, %s73
      %p84 = scmp.eq.s32.totalorder %s17, 0
      %p85 = por %p83, %p84
      %p86 = scmp.ne.s32.totalorder %s72, %s73
      %p87 = scmp.eq.s32.totalorder %s18, 1
      %p88 = por %p86, %p87
      %p90 = scmp.ne.s32.totalorder %s73, %s89
      %p91 = scmp.eq.s32.totalorder %s18, 0
      %p92 = por %p90, %p91
      %p93 = scmp.le.s32.totalorder 1, %s12
      %p94 = scmp.lt.s32.totalorder %s12, 3
      %p95 = pnand %p93, %p94
      %p96 = pneg %p95
      // Predicated region
      $region9: #{build.1} parent=5 // pred_check
        _
      $region10: #{build.1} parent=5 // pred_check_branch
        %98 = sbr.rel (%p95) target = $region12
      $region11: #{build.1} parent=5 // pred_region
        %s99 = ssub.s32 %s12, 1
        // Predicated region
        $region13: #{build.1} parent=11 // pred_check
          %p100 = pneg %p59
        $region14: #{build.1} parent=11 // pred_check_branch
          %102 = sbr.rel (%p100) target = $region16
        $region15: #{build.1} parent=11 // pred_region
          %s104 = ssub.s32 256, 256
          %105 = vsyncadd [#allocation5], %s104
          %s106 = sshll.u32 [#allocation4], 4
          %s107 = int_to_ptr.vmem [resolvable:$true] %s106
          %112 = dma.hbm_to_vmem [thread:$0]  %s1, 256, %s107, [#allocation5], 128, 128, 8
        $region16: #{build.1} parent=11 // pred_fallthru
          _
      $region12: #{build.1} parent=5 // pred_fallthru
        _
      %p113 = scmp.lt.s32.totalorder %s12, 2
      // Predicated region
      $region17: #{build.1} parent=5 // pred_check
        %p114 = pneg %p113
      $region18: #{build.1} parent=5 // pred_check_branch
        %116 = sbr.rel (%p114) target = $region20
      $region19: #{build.1} parent=5 // pred_region
        // Predicated region
        $region21: #{build.1} parent=19 // pred_check
          %p117 = pneg %p32
        $region22: #{build.1} parent=19 // pred_check_branch
          %119 = sbr.rel (%p117) target = $region24
        $region23: #{build.1} parent=19 // pred_region
          %s120 = sand.u32 %s22, 1
          %s121 = scalar_lea.sflag [#allocation3], %s120
          %s122 = sand.u32 %s22, 1
          %s123 = smul.addr %s122, 8
          %s124 = scalar_lea.vmem [#allocation2], %s123
          %s125 = smul.u32 4, %s12
          %s127 = ssub.s32 128, 128
          %128 = vsyncadd %s121, %s127
          %s129 = smul.addr %s125, 32
          %s130 = scalar_lea.hbm %s0, %s129
          %s131 = sshll.u32 %s124, 4
          %s132 = int_to_ptr.vmem [resolvable:$true] %s131
          %137 = dma.hbm_to_vmem [thread:$0]  %s130, 128, %s132, %s121, 32, 32, 2
        $region24: #{build.1} parent=19 // pred_fallthru
          _
      $region20: #{build.1} parent=5 // pred_fallthru
        _
      %p138 = scmp.le.s32.totalorder 1, %s12
      %p139 = scmp.lt.s32.totalorder %s12, 3
      %p140 = pnand %p138, %p139
      %p141 = pneg %p140
      // Predicated region
      $region25: #{build.1} parent=5 // pred_check
        _
      $region26: #{build.1} parent=5 // pred_check_branch
        %143 = sbr.rel (%p140) target = $region28
      $region27: #{build.1} parent=5 // pred_region
        %s144 = ssub.s32 %s12, 1
        %s145 = sand.u32 %s25, 1
        %s146 = scalar_lea.sflag [#allocation3], %s145
        %s147 = sand.u32 %s25, 1
        %s148 = smul.addr %s147, 8
        %s149 = scalar_lea.vmem [#allocation2], %s148
        // Predicated region
        $region29: #{build.1} parent=27 // pred_check
          %p150 = pneg %p38
        $region30: #{build.1} parent=27 // pred_check_branch
          %152 = sbr.rel (%p150) target = $region32
        $region31: #{build.1} parent=27 // pred_region
          %153 = dma.done %s146, 128
        $region32: #{build.1} parent=27 // pred_fallthru
          _
        // Predicated region
        $region33: #{build.1} parent=27 // pred_check
          %p154 = pneg %p59
        $region34: #{build.1} parent=27 // pred_check_branch
          %156 = sbr.rel (%p154) target = $region36
        $region35: #{build.1} parent=27 // pred_region
          %157 = dma.done [#allocation5], 256
        $region36: #{build.1} parent=27 // pred_fallthru
          _
        %s158 = sand.u32 %s25, 1
        %s159 = scalar_lea.sflag [#allocation3], %s158
        %s160 = sand.u32 %s25, 1
        %s161 = smul.addr %s160, 8
        %s162 = scalar_lea.vmem [#allocation2], %s161
        %p163 = pneg %p38
        %p164 = pneg %p35
        %p165 = pneg %p59
        %p166 = pneg %p56
        %p167 = pneg %p85
        %p168 = pneg %p82
        %s169 = sand.u32 %s72, 1
        %s170 = sand.u32 %s72, 1
        %s171 = smul.addr %s170, 64
        %s172 = scalar_lea.vmem [#allocation6], %s171
        %s173 = smul.u32 4, %s17
        %s174 = smul.u32 4, %s17
        %v175 = vld [vmem:[%s149] sm:$0x1]
        %v176 = vld [vmem:[%s149 + $0x2] sm:$0x1]
        %v177 = vld [vmem:[%s149 + $0x4] sm:$0x1]
        %v178 = vld [vmem:[%s149 + $0x6] sm:$0x1]
        %v179 = vld [vmem:[#allocation4] sm:$0xff]
        %v180 = vlaneseq
        %v181 = vshrl.u32 %v180, 7
        %v182 = vsub.s32 0, %v181
        %v183 = vrot.slane %v175, %v182
        %v184 = vlaneseq
        %v185 = vshrl.u32 %v184, 7
        %v186 = vsub.s32 0, %v185
        %v187 = vrot.slane %v176, %v186
        %v188 = vlaneseq
        %v189 = vshrl.u32 %v188, 7
        %v190 = vsub.s32 0, %v189
        %v191 = vrot.slane %v177, %v190
        %v192 = vlaneseq
        %v193 = vshrl.u32 %v192, 7
        %v194 = vsub.s32 0, %v193
        %v195 = vrot.slane %v178, %v194
        %v196 = vadd.f32 %v183, %v179
        %v197 = vadd.f32 %v187, %v179
        %v198 = vadd.f32 %v191, %v179
        %v199 = vadd.f32 %v195, %v179
        %200 = vst [vmem:[%s172] sm:$0xff] %v196
        %201 = vst [vmem:[%s172 + $0x8] sm:$0xff] %v197
        %202 = vst [vmem:[%s172 + $0x10] sm:$0xff] %v198
        %203 = vst [vmem:[%s172 + $0x18] sm:$0xff] %v199
        %v204 = vld [vmem:[%s149 + $0x1] sm:$0x1]
        %v205 = vld [vmem:[%s149 + $0x3] sm:$0x1]
        %v206 = vld [vmem:[%s149 + $0x5] sm:$0x1]
        %v207 = vld [vmem:[%s149 + $0x7] sm:$0x1]
        %s208 = scalar_lea.vmem [#allocation4], 8
        %v209 = vld [vmem:[%s208] sm:$0xff]
        %v210 = vlaneseq
        %v211 = vshrl.u32 %v210, 7
        %v212 = vsub.s32 0, %v211
        %v213 = vrot.slane %v204, %v212
        %v214 = vlaneseq
        %v215 = vshrl.u32 %v214, 7
        %v216 = vsub.s32 0, %v215
        %v217 = vrot.slane %v205, %v216
        %v218 = vlaneseq
        %v219 = vshrl.u32 %v218, 7
        %v220 = vsub.s32 0, %v219
        %v221 = vrot.slane %v206, %v220
        %v222 = vlaneseq
        %v223 = vshrl.u32 %v222, 7
        %v224 = vsub.s32 0, %v223
        %v225 = vrot.slane %v207, %v224
        %v226 = vadd.f32 %v213, %v209
        %v227 = vadd.f32 %v217, %v209
        %v228 = vadd.f32 %v221, %v209
        %v229 = vadd.f32 %v225, %v209
        %s230 = scalar_lea.vmem %s172, 32 [#allocation6]
        %231 = vst [vmem:[%s230] sm:$0xff] %v226
        %232 = vst [vmem:[%s230 + $0x8] sm:$0xff] %v227
        %233 = vst [vmem:[%s230 + $0x10] sm:$0xff] %v228
        %234 = vst [vmem:[%s230 + $0x18] sm:$0xff] %v229
        %s235 = sand.u32 %s72, 1
        %s236 = sand.u32 %s72, 1
        %s237 = smul.addr %s236, 64
        %s238 = scalar_lea.vmem [#allocation6], %s237
        // Predicated region
        $region37: #{build.1} parent=27 // pred_check
          %p239 = pneg %p82
        $region38: #{build.1} parent=27 // pred_check_branch
          %241 = sbr.rel (%p239) target = $region40
        $region39: #{build.1} parent=27 // pred_region
          %s242 = smul.u32 4, %s17
          %s243 = smul.addr %s242, 8
          %s244 = scalar_lea.vmem %s2, %s243
          // Predicated region
          $region41: #{build.1} parent=39 // pred_check
            _
          $region42: #{build.1} parent=39 // pred_check_branch
            %246 = sbr.rel (0) target = $region44
          $region43: #{build.1} parent=39 // pred_region
            // Predicated region
            $region45: #{build.1} parent=43 // pred_check
              _
            $region46: #{build.1} parent=43 // pred_check_branch
              %248 = sbr.rel (0) target = $region48
            $region47: #{build.1} parent=43 // pred_region
              // Predicated region
              $region60: #{build.1} parent=47 // pred_check
                _
              $region61: #{build.1} parent=47 // pred_check_branch
                %278 = sbr.rel (0) target = $region63
              $region62: #{build.1} parent=47 // pred_region
                loop: start=0, step=1, limit=1
                $region64: #{build.1} parent=62 // loop_pre_header
                  _
                $region65: #{build.1} parent=62 // loop_header
                  %s280 = sphi 0, %s284
                  %p281 = scmp.ge.s32.totalorder %s280, 1
                  %s285 = sphi %s238, %s238
                  %s286 = sphi %s244, %s244
                $region66: #{build.1} parent=62 // loop_header_branch
                  %283 = sbr.rel (%p281) target = $region70
                $region67: #{build.1} parent=62 // loop_body
                  %v287 = vld [vmem:[%s285] sm:$0xff]
                  %288 = vst [vmem:[%s286] sm:$0xff] %v287
                  %v289 = vld [vmem:[%s285 + $0x8] sm:$0xff]
                  %290 = vst [vmem:[%s286 + $0x8] sm:$0xff] %v289
                  %v291 = vld [vmem:[%s285 + $0x10] sm:$0xff]
                  %292 = vst [vmem:[%s286 + $0x10] sm:$0xff] %v291
                  %v293 = vld [vmem:[%s285 + $0x18] sm:$0xff]
                  %294 = vst [vmem:[%s286 + $0x18] sm:$0xff] %v293
                  %v295 = vld [vmem:[%s285 + $0x20] sm:$0xff]
                  %296 = vst [vmem:[%s286 + $0x40] sm:$0xff] %v295
                  %v297 = vld [vmem:[%s285 + $0x28] sm:$0xff]
                  %298 = vst [vmem:[%s286 + $0x48] sm:$0xff] %v297
                  %v299 = vld [vmem:[%s285 + $0x30] sm:$0xff]
                  %300 = vst [vmem:[%s286 + $0x50] sm:$0xff] %v299
                  %v301 = vld [vmem:[%s285 + $0x38] sm:$0xff]
                  %302 = vst [vmem:[%s286 + $0x58] sm:$0xff] %v301
                $region68: #{build.1} parent=62 // loop_footer
                  %s284 = sadd.s32 1, %s280
                $region69: #{build.1} parent=62 // loop_footer_branch
                  %279 = sbr.rel target = $region65
                $region70: #{build.1} parent=62 // loop_exit
                  _
              $region63: #{build.1} parent=47 // pred_fallthru
                _
              // Predicated region
              $region71: #{build.1} parent=47 // pred_check
                _
              $region72: #{build.1} parent=47 // pred_check_branch
                %304 = sbr.rel target = $region74
              $region73: #{build.1} parent=47 // pred_region
                _
              $region74: #{build.1} parent=47 // pred_fallthru
                _
            $region48: #{build.1} parent=43 // pred_fallthru
              _
            // Predicated region
            $region49: #{build.1} parent=43 // pred_check
              _
            $region50: #{build.1} parent=43 // pred_check_branch
              %250 = sbr.rel target = $region52
            $region51: #{build.1} parent=43 // pred_region
              %s252 = ssub.s32 256, 1
              loop: start=0, step=1, limit=1
              $region53: #{build.1} parent=51 // loop_pre_header
                _
              $region54: #{build.1} parent=51 // loop_header
                %s254 = sphi 0, %s258
                %p255 = scmp.ge.s32.totalorder %s254, 1
                %s259 = sphi %s238, %s238
                %s260 = sphi %s244, %s244
              $region55: #{build.1} parent=51 // loop_header_branch
                %257 = sbr.rel (%p255) target = $region59
              $region56: #{build.1} parent=51 // loop_body
                %v261 = vld [vmem:[%s259] sm:%s252]
                %262 = vst [vmem:[%s260] sm:%s252] %v261
                %v263 = vld [vmem:[%s259 + $0x8] sm:%s252]
                %264 = vst [vmem:[%s260 + $0x8] sm:%s252] %v263
                %v265 = vld [vmem:[%s259 + $0x10] sm:%s252]
                %266 = vst [vmem:[%s260 + $0x10] sm:%s252] %v265
                %v267 = vld [vmem:[%s259 + $0x18] sm:%s252]
                %268 = vst [vmem:[%s260 + $0x18] sm:%s252] %v267
                %v269 = vld [vmem:[%s259 + $0x20] sm:%s252]
                %270 = vst [vmem:[%s260 + $0x40] sm:%s252] %v269
                %v271 = vld [vmem:[%s259 + $0x28] sm:%s252]
                %272 = vst [vmem:[%s260 + $0x48] sm:%s252] %v271
                %v273 = vld [vmem:[%s259 + $0x30] sm:%s252]
                %274 = vst [vmem:[%s260 + $0x50] sm:%s252] %v273
                %v275 = vld [vmem:[%s259 + $0x38] sm:%s252]
                %276 = vst [vmem:[%s260 + $0x58] sm:%s252] %v275
              $region57: #{build.1} parent=51 // loop_footer
                %s258 = sadd.s32 1, %s254
              $region58: #{build.1} parent=51 // loop_footer_branch
                %253 = sbr.rel target = $region54
              $region59: #{build.1} parent=51 // loop_exit
                _
            $region52: #{build.1} parent=43 // pred_fallthru
              _
          $region44: #{build.1} parent=39 // pred_fallthru
            _
          %305 = vnop
        $region40: #{build.1} parent=27 // pred_fallthru
          _
      $region28: #{build.1} parent=5 // pred_fallthru
        _
      %p306 = scmp.le.s32.totalorder 2, %s12
      // Predicated region
      $region75: #{build.1} parent=5 // pred_check
        %p307 = pneg %p306
      $region76: #{build.1} parent=5 // pred_check_branch
        %309 = sbr.rel (%p307) target = $region78
      $region77: #{build.1} parent=5 // pred_region
        %s310 = ssub.s32 %s12, 2
        // Predicated region
        $region79: #{build.1} parent=77 // pred_check
          %p311 = pneg %p88
        $region80: #{build.1} parent=77 // pred_check_branch
          %313 = sbr.rel (%p311) target = $region82
        $region81: #{build.1} parent=77 // pred_region
          %s314 = sand.u32 %s73, 1
          %s315 = sand.u32 %s73, 1
          %s316 = smul.addr %s315, 64
          %s317 = scalar_lea.vmem [#allocation6], %s316
        $region82: #{build.1} parent=77 // pred_fallthru
          _
      $region78: #{build.1} parent=5 // pred_fallthru
        _
    $region6: #{build.1} parent=1 // loop_footer
      %s16 = sadd.s32 1, %s12
    $region7: #{build.1} parent=1 // loop_footer_branch
      %11 = sbr.rel target = $region3
    $region8: #{build.1} parent=1 // loop_exit
      _
    %318 = vsyncpa [#allocation3], 1
    %s319 = scalar_lea.sflag [#allocation3], 1
    %320 = vsyncpa %s319, 1
    %321 = vsyncpa [#allocation5], 1

</llo_original>
